<compile_context>
chip_gen: v7x
topology: tpu7x:2x2x1
jax: 0.10.0
libtpu: 0.0.40
codegen_flags: <defaults>
</compile_context>

<pallas_src>
import functools
import math

import numpy as np
import jax
import jax.numpy as jnp
from jax.experimental import pallas as pl
from jax.experimental.pallas import tpu as pltpu


_LANE = 1024           # last-dim width: multiple of 128 -> unmasked vector stores
_MAX_BLOCK_ROWS = 512  # 512 x 1024 f32 = 2 MiB/block; in+out double-buffered ≈ 8 MiB


def _scaled_leaky_relu_kernel(x_ref, o_ref, *, negative_slope, scale):
    # Elementwise: leaky_relu(x) * sqrt(2).  Upcast to f32 for the VPU math
    # (free on the bandwidth-bound path, avoids bf16 VALU penalties on v5e),
    # cast back to the output dtype at the store.
    x = x_ref[...].astype(jnp.float32)
    y = jnp.where(x >= 0, x, x * negative_slope) * scale
    o_ref[...] = y.astype(o_ref.dtype)


def scaled_leaky_relu(x, negative_slope=0.2):
    orig_shape = x.shape
    orig_dtype = x.dtype
    n = int(np.prod(orig_shape)) if len(orig_shape) else 1

    # Flatten + zero-pad to a lane-dense (rows_padded, _LANE) slab.
    rows = -(-n // _LANE)
    block_rows = min(_MAX_BLOCK_ROWS, max(8, ((rows + 7) // 8) * 8))
    rows_padded = -(-rows // block_rows) * block_rows
    n_padded = rows_padded * _LANE

    x_flat = jnp.ravel(x)
    if n_padded != n:
        x_flat = jnp.pad(x_flat, (0, n_padded - n))
    x2d = x_flat.reshape(rows_padded, _LANE)

    kernel = functools.partial(
        _scaled_leaky_relu_kernel,
        negative_slope=float(negative_slope),
        scale=math.sqrt(2.0),
    )

    out2d = pl.pallas_call(
        kernel,
        out_shape=jax.ShapeDtypeStruct((rows_padded, _LANE), orig_dtype),
        grid=(rows_padded // block_rows,),
        in_specs=[pl.BlockSpec((block_rows, _LANE), lambda i: (i, 0))],
        out_specs=pl.BlockSpec((block_rows, _LANE), lambda i: (i, 0)),
        compiler_params=pltpu.CompilerParams(
            dimension_semantics=("parallel",)),
    )(x2d)

    return out2d.reshape(-1)[:n].reshape(orig_shape)


def scaled_leaky_relu_reference(x, negative_slope=0.2):
    xf = x.astype(jnp.float32)
    y = jnp.where(xf >= 0, xf, xf * negative_slope) * math.sqrt(2.0)
    return y.astype(x.dtype)


if __name__ == "__main__":
    key = jax.random.PRNGKey(0)
    k1, k2 = jax.random.split(key, 2)

    # Primary test: NCHW tensor like the StyleGAN activations this module sees.
    x = jax.random.normal(k1, (2, 4, 16, 16), jnp.float32)
    out = scaled_leaky_relu(x, negative_slope=0.2)
    out = jax.block_until_ready(out)
    ref = scaled_leaky_relu_reference(x, negative_slope=0.2)
    np.testing.assert_allclose(np.asarray(out), np.asarray(ref),
                               rtol=1e-5, atol=1e-5)

    # Secondary test: odd, non-lane-aligned shape to exercise the pad/unpad path.
    x2 = jax.random.normal(k2, (3, 5, 7), jnp.float32)
    out2 = jax.block_until_ready(scaled_leaky_relu(x2, negative_slope=0.2))
    ref2 = scaled_leaky_relu_reference(x2, negative_slope=0.2)
    np.testing.assert_allclose(np.asarray(out2), np.asarray(ref2),
                               rtol=1e-5, atol=1e-5)

    print("KERNEL_OK")
</pallas_src>

<mosaic_0001>
module attributes {stable_mosaic.version = 11 : i64} {
  func.func @_scaled_leaky_relu_kernel(%arg0: i32, %arg1: memref<8x1024xf32, #tpu.memory_space<vmem>>, %arg2: memref<8x1024xf32, #tpu.memory_space<vmem>>) attributes {dimension_semantics = [#tpu.dimension_semantics<parallel>], iteration_bounds = array<i64: 1>, scalar_prefetch = 0 : i64, scratch_operands = 0 : i64, tpu.core_type = #tpu.core_type<tc>, window_params = [{transform_indices = @transform_0, window_bounds = array<i64: 8, 1024>}, {transform_indices = @transform_1, window_bounds = array<i64: 8, 1024>}]} {
    %c0 = arith.constant 0 : index
    %c0_0 = arith.constant 0 : index
    %0 = vector.load %arg1[%c0, %c0_0] : memref<8x1024xf32, #tpu.memory_space<vmem>>, vector<8x1024xf32>
    %cst = arith.constant 0.000000e+00 : f32
    %1 = vector.broadcast %cst : f32 to vector<8x1024xf32>
    %2 = arith.cmpf oge, %0, %1 : vector<8x1024xf32>
    %cst_1 = arith.constant 2.000000e-01 : f32
    %3 = vector.broadcast %cst_1 : f32 to vector<8x1024xf32>
    %4 = arith.mulf %0, %3 : vector<8x1024xf32>
    %5 = arith.select %2, %0, %4 : vector<8x1024xi1>, vector<8x1024xf32>
    %cst_2 = arith.constant 1.41421354 : f32
    %6 = vector.broadcast %cst_2 : f32 to vector<8x1024xf32>
    %7 = arith.mulf %5, %6 : vector<8x1024xf32>
    %c0_3 = arith.constant 0 : index
    %c0_4 = arith.constant 0 : index
    %8 = vector.load %arg2[%c0_3, %c0_4] : memref<8x1024xf32, #tpu.memory_space<vmem>>, vector<8x1024xf32>
    tpu.vector_store %arg2[%c0_3, %c0_4], %7 {strides = array<i32>} : memref<8x1024xf32, #tpu.memory_space<vmem>>, vector<8x1024xf32>,
    return
  }
  func.func @transform_0(%arg0: i32) -> (i32, i32) {
    %c0_i32 = arith.constant 0 : i32
    %c0_i32_0 = arith.constant 0 : i32
    return %arg0, %c0_i32 : i32, i32
  }
  func.func @transform_1(%arg0: i32) -> (i32, i32) {
    %c0_i32 = arith.constant 0 : i32
    %c0_i32_0 = arith.constant 0 : i32
    return %arg0, %c0_i32 : i32, i32
  }
}

</mosaic_0001>

<llo_original>
// kernel: tpu_custom_call.1
$region0: #{tpu_custom_call.1}
  #allocation0 [shape = 'u32[]', space=smem, size = 0x4, offset = 0x4, fixed_abs, tag = 'smem constant byte address 0x4 - core index']
  #allocation1 [shape = 'u32[144,128]{1,0:T(1,128)}', space=vmem, size = 0x12000, scoped, tag = 'internal scratch']
  %s0 = inlined_call_operand.hbm [shape: f32[8,1024], index: 0, kind: input, shape index: {}]
  %s1 = inlined_call_operand.hbm [shape: f32[8,1024], index: 1, kind: output, shape index: {}]
  %s2 = sld [smem:[#allocation0]]
  $region18: #{tpu_custom_call.1} parent=0
    _
  %s4 = ssub.s32 1, %s2
  %s5 = scalar_select 0, %s4, %s2
  $region1: #{tpu_custom_call.1} parent=0
    #allocation2 [shape = 'u8[32768]{0}', space=vmem, size = 0x8000, scoped, tag = 'input window, operand 0, single buffered']
    #allocation3 [shape = 's32[1]{0}', space=sflag, size = 0x4, scoped, tag = 'scoped memory for tpu_custom_call.1']
    #allocation4 [shape = 's32[1]{0}', space=sflag, size = 0x4, scoped, tag = 'scoped memory for tpu_custom_call.1']
    #allocation5 [shape = 'u8[32768]{0}', space=vmem, size = 0x8000, scoped, tag = 'output window, operand 0, single buffered']
    %6 = vsyncpa [#allocation3], 0
    %7 = vsyncpa [#allocation4], 0
    // Predicated region
    $region2: #{tpu_custom_call.1} parent=1 // pred_check
      _
    $region3: #{tpu_custom_call.1} parent=1 // pred_check_branch
      %9 = sbr.rel (0) target = $region5
    $region4: #{tpu_custom_call.1} parent=1 // pred_region
      %s11 = ssub.s32 1024, 1024
      %12 = vsyncadd [#allocation3], %s11
      %s14 = sshll.u32 [#allocation2], 4
      %s15 = int_to_ptr.vmem [resolvable:$true] %s14
      %17 = dma.hbm_to_vmem [thread:$0]  %s0, 1024, %s15, [#allocation3]
    $region5: #{tpu_custom_call.1} parent=1 // pred_fallthru
      _
    // Predicated region
    $region6: #{tpu_custom_call.1} parent=1 // pred_check
      _
    $region7: #{tpu_custom_call.1} parent=1 // pred_check_branch
      %19 = sbr.rel (0) target = $region9
    $region8: #{tpu_custom_call.1} parent=1 // pred_region
      %20 = dma.done [#allocation3], 1024
    $region9: #{tpu_custom_call.1} parent=1 // pred_fallthru
      _
    %v21 = vld [vmem:[#allocation2] sm:$0xff]
    %v22 = vld [vmem:[#allocation2 + $0x8] sm:$0xff]
    %v23 = vld [vmem:[#allocation2 + $0x10] sm:$0xff]
    %v24 = vld [vmem:[#allocation2 + $0x18] sm:$0xff]
    %v25 = vld [vmem:[#allocation2 + $0x20] sm:$0xff]
    %v26 = vld [vmem:[#allocation2 + $0x28] sm:$0xff]
    %v27 = vld [vmem:[#allocation2 + $0x30] sm:$0xff]
    %v28 = vld [vmem:[#allocation2 + $0x38] sm:$0xff]
    %vm29 = vcmp.ge.f32.partialorder %v21, 0.0
    %vm30 = vcmp.ge.f32.partialorder %v22, 0.0
    %vm31 = vcmp.ge.f32.partialorder %v23, 0.0
    %vm32 = vcmp.ge.f32.partialorder %v24, 0.0
    %vm33 = vcmp.ge.f32.partialorder %v25, 0.0
    %vm34 = vcmp.ge.f32.partialorder %v26, 0.0
    %vm35 = vcmp.ge.f32.partialorder %v27, 0.0
    %vm36 = vcmp.ge.f32.partialorder %v28, 0.0
    %v37 = vmul.f32 %v21, 0.2
    %v38 = vmul.f32 %v22, 0.2
    %v39 = vmul.f32 %v23, 0.2
    %v40 = vmul.f32 %v24, 0.2
    %v41 = vmul.f32 %v25, 0.2
    %v42 = vmul.f32 %v26, 0.2
    %v43 = vmul.f32 %v27, 0.2
    %v44 = vmul.f32 %v28, 0.2
    %v45 = vsel %vm29, %v21, %v37
    %v46 = vsel %vm30, %v22, %v38
    %v47 = vsel %vm31, %v23, %v39
    %v48 = vsel %vm32, %v24, %v40
    %v49 = vsel %vm33, %v25, %v41
    %v50 = vsel %vm34, %v26, %v42
    %v51 = vsel %vm35, %v27, %v43
    %v52 = vsel %vm36, %v28, %v44
    %v53 = vmul.f32 %v45, 1.4142135
    %v54 = vmul.f32 %v46, 1.4142135
    %v55 = vmul.f32 %v47, 1.4142135
    %v56 = vmul.f32 %v48, 1.4142135
    %v57 = vmul.f32 %v49, 1.4142135
    %v58 = vmul.f32 %v50, 1.4142135
    %v59 = vmul.f32 %v51, 1.4142135
    %v60 = vmul.f32 %v52, 1.4142135
    %61 = vst [vmem:[#allocation5] sm:$0xff] %v53
    %62 = vst [vmem:[#allocation5 + $0x8] sm:$0xff] %v54
    %63 = vst [vmem:[#allocation5 + $0x10] sm:$0xff] %v55
    %64 = vst [vmem:[#allocation5 + $0x18] sm:$0xff] %v56
    %65 = vst [vmem:[#allocation5 + $0x20] sm:$0xff] %v57
    %66 = vst [vmem:[#allocation5 + $0x28] sm:$0xff] %v58
    %67 = vst [vmem:[#allocation5 + $0x30] sm:$0xff] %v59
    %68 = vst [vmem:[#allocation5 + $0x38] sm:$0xff] %v60
    // Predicated region
    $region10: #{tpu_custom_call.1} parent=1 // pred_check
      _
    $region11: #{tpu_custom_call.1} parent=1 // pred_check_branch
      %70 = sbr.rel (0) target = $region13
    $region12: #{tpu_custom_call.1} parent=1 // pred_region
      %s72 = ssub.s32 1024, 1024
      %73 = vsyncadd [#allocation4], %s72
      %s75 = sshll.u32 [#allocation5], 4
      %s76 = int_to_ptr.vmem [resolvable:$true] %s75
      %78 = dma.vmem_to_hbm [thread:$0]  %s76, 1024, %s1, [#allocation4]
    $region13: #{tpu_custom_call.1} parent=1 // pred_fallthru
      _
    // Predicated region
    $region14: #{tpu_custom_call.1} parent=1 // pred_check
      _
    $region15: #{tpu_custom_call.1} parent=1 // pred_check_branch
      %80 = sbr.rel (0) target = $region17
    $region16: #{tpu_custom_call.1} parent=1 // pred_region
      %81 = dma.done [#allocation4], 1024
    $region17: #{tpu_custom_call.1} parent=1 // pred_fallthru
      _
    %82 = vsyncpa [#allocation3], 1
    %83 = vsyncpa [#allocation4], 1

</llo_original>
